<compile_context>
chip_gen: v7x
topology: tpu7x:2x2x1
jax: 0.10.0
libtpu: 0.0.40
codegen_flags: <defaults>
</compile_context>

<pallas_src>
import math

import jax
import jax.numpy as jnp
from jax.experimental import pallas as pl
from jax.experimental.pallas import tpu as pltpu

# Navigation environment default goal ("end") position.
DEFAULT_END = (8.0, 9.0)
LANE = 128


def _round_up(x, m):
    return ((x + m - 1) // m) * m


def navigation_reward_kernel(xy_ref, goal_ref, out_ref):
    # xy_ref  : (2, TB)  lane-dense next_state[..., :2] (batch on lanes)
    # goal_ref: (2, 1)   goal position
    # out_ref : (1, TB)  reward per batch element
    dx = xy_ref[0:1, :] - goal_ref[0:1, :]      # (1, TB)
    dy = xy_ref[1:2, :] - goal_ref[1:2, :]      # (1, TB)
    out_ref[...] = -jnp.sqrt(dx * dx + dy * dy)


def navigation_reward(state, action, next_state, goal=None, *, block_b=8192):
    """Pallas NavigationReward. Returns reward with shape = batch shape of next_state."""
    del state, action  # unused by the reward function, never sent to the TPU kernel
    if goal is None:
        goal = DEFAULT_END
    goal = jnp.asarray(goal, dtype=jnp.float32).reshape(2, 1)

    batch_shape = next_state.shape[:-1]
    b = math.prod(batch_shape) if batch_shape else 1

    # Slice to the 2 used features and flatten the batch in the wrapper
    # (only 8 bytes/row cross HBM instead of the full observation).
    xy = next_state.reshape(b, next_state.shape[-1])[:, :2].astype(jnp.float32)

    # Batch tile: multiple of 128 lanes, at most block_b rows (v7x: consider block_b=4096).
    tb = min(block_b, _round_up(max(b, 1), LANE))
    bp = _round_up(max(b, 1), tb)
    if bp != b:
        xy = jnp.pad(xy, ((0, bp - b), (0, 0)))
    xy_t = xy.T  # (2, bp): lane-dense, batch on lanes (layout plumbing in wrapper)

    out = pl.pallas_call(
        navigation_reward_kernel,
        out_shape=jax.ShapeDtypeStruct((1, bp), jnp.float32),
        grid=(bp // tb,),
        in_specs=[
            pl.BlockSpec((2, tb), lambda i: (0, i)),   # next_state xy tile
            pl.BlockSpec((2, 1), lambda i: (0, 0)),    # goal (resident)
        ],
        out_specs=pl.BlockSpec((1, tb), lambda i: (0, i)),
        compiler_params=pltpu.CompilerParams(
            dimension_semantics=("parallel",),
        ),
        cost_estimate=pl.CostEstimate(
            flops=6 * bp, transcendentals=bp, bytes_accessed=12 * bp + 8
        ),
    )(xy_t, goal)

    return out[0, :b].reshape(batch_shape)


def reference_reward(state, action, next_state, goal):
    del state, action
    return -jnp.linalg.norm(next_state[..., :2] - jnp.asarray(goal, jnp.float32), axis=-1)


if __name__ == "__main__":
    # Navigation env: observation = (x, y, time) -> obs_dim = 3, action_dim = 2.
    B, OBS_DIM, ACT_DIM = 8, 3, 2

    key = jax.random.PRNGKey(0)
    k1, k2, k3 = jax.random.split(key, 3)
    state = jax.random.normal(k1, (B, OBS_DIM), dtype=jnp.float32)
    action = jax.random.normal(k2, (B, ACT_DIM), dtype=jnp.float32)
    next_state = jax.random.normal(k3, (B, OBS_DIM), dtype=jnp.float32)
    goal = jnp.asarray(DEFAULT_END, dtype=jnp.float32)

    reward = jax.block_until_ready(navigation_reward(state, action, next_state, goal))
    ref = reference_reward(state, action, next_state, goal)

    assert reward.shape == (B,), reward.shape
    assert jnp.allclose(reward, ref, atol=1e-5, rtol=1e-5), (reward, ref)
    print("KERNEL_OK")
</pallas_src>

<mosaic_0001>
module attributes {stable_mosaic.version = 11 : i64} {
  func.func @navigation_reward_kernel(%arg0: i32, %arg1: memref<2x128xf32, #tpu.memory_space<vmem>>, %arg2: memref<2x1xf32, #tpu.memory_space<vmem>>, %arg3: memref<1x128xf32, #tpu.memory_space<vmem>>) attributes {dimension_semantics = [#tpu.dimension_semantics<parallel>], iteration_bounds = array<i64: 1>, scalar_prefetch = 0 : i64, scratch_operands = 0 : i64, tpu.core_type = #tpu.core_type<tc>, window_params = [{transform_indices = @transform_0, window_bounds = array<i64: 2, 128>}, {pipeline_mode = #tpu.pipeline_mode<synchronous>, transform_indices = @transform_1, window_bounds = array<i64: 2, 1>}, {transform_indices = @transform_2, window_bounds = array<i64: 1, 128>}]} {
    %c0 = arith.constant 0 : index
    %c0_0 = arith.constant 0 : index
    %0 = vector.load %arg1[%c0, %c0_0] : memref<2x128xf32, #tpu.memory_space<vmem>>, vector<1x128xf32>
    %c0_1 = arith.constant 0 : index
    %c0_2 = arith.constant 0 : index
    %1 = vector.load %arg2[%c0_1, %c0_2] : memref<2x1xf32, #tpu.memory_space<vmem>>, vector<1x1xf32>
    %2 = vector.broadcast %1 : vector<1x1xf32> to vector<1x128xf32>
    %3 = arith.subf %0, %2 : vector<1x128xf32>
    %c1 = arith.constant 1 : index
    %c0_3 = arith.constant 0 : index
    %4 = vector.load %arg1[%c1, %c0_3] : memref<2x128xf32, #tpu.memory_space<vmem>>, vector<1x128xf32>
    %c1_4 = arith.constant 1 : index
    %c0_5 = arith.constant 0 : index
    %5 = vector.load %arg2[%c1_4, %c0_5] : memref<2x1xf32, #tpu.memory_space<vmem>>, vector<1x1xf32>
    %6 = vector.broadcast %5 : vector<1x1xf32> to vector<1x128xf32>
    %7 = arith.subf %4, %6 : vector<1x128xf32>
    %8 = arith.mulf %3, %3 : vector<1x128xf32>
    %9 = arith.mulf %7, %7 : vector<1x128xf32>
    %10 = arith.addf %8, %9 : vector<1x128xf32>
    %11 = math.sqrt %10 : vector<1x128xf32>
    %cst = arith.constant 0.000000e+00 : f32
    %12 = vector.broadcast %cst : f32 to vector<1x128xf32>
    %13 = arith.subf %12, %11 : vector<1x128xf32>
    %c0_6 = arith.constant 0 : index
    %c0_7 = arith.constant 0 : index
    %14 = vector.load %arg3[%c0_6, %c0_7] : memref<1x128xf32, #tpu.memory_space<vmem>>, vector<1x128xf32>
    tpu.vector_store %arg3[%c0_6, %c0_7], %13 {strides = array<i32>} : memref<1x128xf32, #tpu.memory_space<vmem>>, vector<1x128xf32>,
    return
  }
  func.func @transform_0(%arg0: i32) -> (i32, i32) {
    %c0_i32 = arith.constant 0 : i32
    %c0_i32_0 = arith.constant 0 : i32
    return %c0_i32, %arg0 : i32, i32
  }
  func.func @transform_1(%arg0: i32) -> (i32, i32) {
    %c0_i32 = arith.constant 0 : i32
    %c0_i32_0 = arith.constant 0 : i32
    %c0_i32_1 = arith.constant 0 : i32
    return %c0_i32, %c0_i32_0 : i32, i32
  }
  func.func @transform_2(%arg0: i32) -> (i32, i32) {
    %c0_i32 = arith.constant 0 : i32
    %c0_i32_0 = arith.constant 0 : i32
    return %c0_i32, %arg0 : i32, i32
  }
}

</mosaic_0001>

<llo_original>
// kernel: tpu_custom_call.1
$region0: #{tpu_custom_call.1}
  #allocation0 [shape = 'u32[]', space=smem, size = 0x4, offset = 0x4, fixed_abs, tag = 'smem constant byte address 0x4 - core index']
  #allocation1 [shape = 'u32[144,128]{1,0:T(1,128)}', space=vmem, size = 0x12000, scoped, tag = 'internal scratch']
  %s0 = inlined_call_operand.vmem [shape: f32[2,128], index: 0, kind: input, shape index: {}]
  %s1 = inlined_call_operand.vmem [shape: f32[2,1], index: 1, kind: input, shape index: {}]
  %s2 = inlined_call_operand.hbm [shape: f32[1,128], index: 2, kind: output, shape index: {}]
  %s3 = sld [smem:[#allocation0]]
  $region18: #{tpu_custom_call.1} parent=0
    _
  %s5 = ssub.s32 1, %s3
  %s6 = scalar_select 0, %s5, %s3
  $region1: #{tpu_custom_call.1} parent=0
    #allocation2 [shape = 'u8[512]{0}', space=vmem, size = 0x400, scoped, tag = 'output window, operand 0, single buffered']
    #allocation3 [shape = 's32[1]{0}', space=sflag, size = 0x4, scoped, tag = 'scoped memory for tpu_custom_call.1']
    %7 = vsyncpa [#allocation3], 0
    // Predicated region
    $region2: #{tpu_custom_call.1} parent=1 // pred_check
      _
    $region3: #{tpu_custom_call.1} parent=1 // pred_check_branch
      %9 = sbr.rel (0) target = $region5
    $region4: #{tpu_custom_call.1} parent=1 // pred_region
      _
    $region5: #{tpu_custom_call.1} parent=1 // pred_fallthru
      _
    // Predicated region
    $region6: #{tpu_custom_call.1} parent=1 // pred_check
      _
    $region7: #{tpu_custom_call.1} parent=1 // pred_check_branch
      %11 = sbr.rel (0) target = $region9
    $region8: #{tpu_custom_call.1} parent=1 // pred_region
      _
    $region9: #{tpu_custom_call.1} parent=1 // pred_fallthru
      _
    %v12 = vld [vmem:[%s0] sm:$0x1]
    %v13 = vld [vmem:[%s1] sm:$0x1]
    %15 = vset.pattern.permute.xlu0 0
    %16 = vperm.xlu0 %15, %v13
    %v17 = vpop.permute.xlu0 %16
    %v19 = vsub.f32 %v12, %v17
    %v20 = vld [vmem:[%s0 + $0x1] sm:$0x1]
    %v21 = vld [vmem:[%s1 + $0x1] sm:$0x1]
    %23 = vset.pattern.permute.xlu0 0
    %24 = vperm.xlu0 %23, %v21
    %v25 = vpop.permute.xlu0 %24
    %v27 = vsub.f32 %v20, %v25
    %v28 = vmul.f32 %v19, %v19
    %v29 = vmul.f32 %v27, %v27
    %v30 = vadd.f32 %v28, %v29
    %v31 = vrsqrt.pop %v30
    %v32 = vmul.f32 %v30, %v31
    %vm33 = vcmp.eq.f32.partialorder %v30, inf
    %v34 = vsel %vm33, %v30, %v32
    %vm35 = vcmp.eq.f32.partialorder %v30, 0.0
    %v36 = vand.u32 %v30, 2147483648
    %v37 = vsel %vm35, %v36, %v34
    %v38 = vsub.f32 0.0, %v37
    %39 = vst [vmem:[#allocation2] sm:$0x1] %v38
    // Predicated region
    $region10: #{tpu_custom_call.1} parent=1 // pred_check
      _
    $region11: #{tpu_custom_call.1} parent=1 // pred_check_branch
      %41 = sbr.rel (0) target = $region13
    $region12: #{tpu_custom_call.1} parent=1 // pred_region
      %s43 = ssub.s32 16, 16
      %44 = vsyncadd [#allocation3], %s43
      %s46 = sshll.u32 [#allocation2], 4
      %s47 = int_to_ptr.vmem [resolvable:$true] %s46
      %49 = dma.vmem_to_hbm [thread:$0]  %s47, 16, %s2, [#allocation3]
    $region13: #{tpu_custom_call.1} parent=1 // pred_fallthru
      _
    // Predicated region
    $region14: #{tpu_custom_call.1} parent=1 // pred_check
      _
    $region15: #{tpu_custom_call.1} parent=1 // pred_check_branch
      %51 = sbr.rel (0) target = $region17
    $region16: #{tpu_custom_call.1} parent=1 // pred_region
      %52 = dma.done [#allocation3], 16
    $region17: #{tpu_custom_call.1} parent=1 // pred_fallthru
      _
    %53 = vsyncpa [#allocation3], 1

</llo_original>
